<compile_context>
chip_gen: v6e
topology: v6e:2x2x1
jax: 0.10.0
libtpu: 0.0.40
codegen_flags: <defaults>
</compile_context>

<pallas_src>
import jax
import jax.numpy as jnp
from jax.experimental import pallas as pl
from jax.experimental.pallas import tpu as pltpu


def _dummy_dynamics_kernel(eps_ref, noise_ref, out_ref):
    # eps_ref   : SMEM (1,)   f32   learned scalar parameter
    # noise_ref : VMEM (Rt,N) f32   rows = (molecule, xyz-axis) pairs, lanes = atoms
    # out_ref   : VMEM (Rt,N)       eps * (noise - COM)
    noise = noise_ref[...]
    com = jnp.mean(noise, axis=-1, keepdims=True)       # center of mass over atoms
    # eps * (noise - mean(noise)) == (eps*noise) - mean(eps*noise): one mul, after the reduce
    out_ref[...] = (eps_ref[0] * (noise - com)).astype(out_ref.dtype)


def dummy_dynamics_forward(eps_param, coords, temb=None, *, key=None):
    """JAX/Pallas equivalent of DummyDynamics.forward.

    eps_param : (1,) float32 parameter (nn.Parameter(torch.ones(1)))
    coords    : (B, N, 3) float32 -- M.coords (only shape/dtype are used)
    temb      : unused (the PyTorch module ignores temb)
    key       : PRNG key for the Gaussian noise (defaults to PRNGKey(0))
    """
    del temb  # unused, exactly like the reference module
    if key is None:
        key = jax.random.PRNGKey(0)
    B, N, D = coords.shape
    R = B * D  # one row per (molecule, coordinate-axis) pair
    dtype = coords.dtype

    # Std-normal noise, generated directly in the lane-dense (R, N) layout.
    noise = jax.random.normal(key, (R, N), dtype=jnp.float32)

    # Learned eps as an SMEM scalar.
    eps_smem = jnp.asarray(eps_param, dtype=jnp.float32).reshape(1)

    # Row tiling: lane-dense blocks (atoms on the 128-lane axis), ~2 MiB each,
    # so the double-buffered input + output tiles stay well under the scoped
    # VMEM default on v5e (16 MiB) and v6e/v7x (32 MiB).
    bytes_per_row = N * 4
    max_rows = max(8, (2 * 1024 * 1024) // bytes_per_row)
    if R <= max_rows:
        rt = R                      # whole batch in one block (full-dim block)
    else:
        rt = (max_rows // 8) * 8    # multiple of 8 sublanes
    grid_r = pl.cdiv(R, rt)

    out_flat = pl.pallas_call(
        _dummy_dynamics_kernel,
        out_shape=jax.ShapeDtypeStruct((R, N), dtype),
        grid=(grid_r,),
        in_specs=[
            pl.BlockSpec(memory_space=pltpu.MemorySpace.SMEM),   # eps scalar
            pl.BlockSpec((rt, N), lambda r: (r, 0)),             # noise tile
        ],
        out_specs=pl.BlockSpec((rt, N), lambda r: (r, 0)),
        compiler_params=pltpu.CompilerParams(
            dimension_semantics=("parallel",),
        ),
    )(eps_smem, noise)

    # Layout plumbing back to the module's (B, N, 3) convention.
    return out_flat.reshape(B, D, N).transpose(0, 2, 1)


if __name__ == "__main__":
    key = jax.random.PRNGKey(0)
    k_coords, k_noise = jax.random.split(key)

    B, N, D = 2, 8, 3  # small molecule batch: 2 molecules, 8 atoms, xyz
    coords = jax.random.normal(k_coords, (B, N, D), dtype=jnp.float32)

    # Parameter init: nn.Parameter(torch.ones(1))
    eps_param = jnp.ones((1,), dtype=jnp.float32)

    out = dummy_dynamics_forward(eps_param, coords, temb=None, key=k_noise)
    out = jax.block_until_ready(out)

    assert out.shape == (B, N, D)
    assert bool(jnp.all(jnp.isfinite(out)))
    assert float(jnp.std(out)) > 0.0
    # Defining invariant of zeroed_com: per-molecule center of mass is zero.
    assert jnp.allclose(jnp.mean(out, axis=1), 0.0, atol=1e-5)

    # Pure-JAX reference: eps * (noise - mean over atoms), same noise stream.
    noise_ref = jax.random.normal(k_noise, (B * D, N), dtype=jnp.float32)
    ref = (eps_param[0] * (noise_ref - jnp.mean(noise_ref, axis=-1, keepdims=True)))
    ref = ref.reshape(B, D, N).transpose(0, 2, 1)
    assert jnp.allclose(out, ref, atol=1e-6, rtol=1e-6)

    # eps enters linearly and the noise stream is key-deterministic:
    # doubling eps with the same key must exactly double the output.
    out2 = dummy_dynamics_forward(2.0 * eps_param, coords, temb=None, key=k_noise)
    out2 = jax.block_until_ready(out2)
    assert jnp.allclose(out2, 2.0 * out, atol=1e-5, rtol=1e-5)

    # Slightly larger, lane-dense shape sanity check (atoms fill the lane axis).
    B2, N2 = 4, 128
    coords2 = jax.random.normal(k_coords, (B2, N2, D), dtype=jnp.float32)
    out3 = jax.block_until_ready(
        dummy_dynamics_forward(eps_param, coords2, temb=None, key=k_noise))
    assert out3.shape == (B2, N2, D)
    assert jnp.allclose(jnp.mean(out3, axis=1), 0.0, atol=1e-5)

    print("KERNEL_OK")
</pallas_src>

<mosaic_0001>
module attributes {stable_mosaic.version = 11 : i64} {
  func.func @_dummy_dynamics_kernel(%arg0: i32, %arg1: memref<1xf32, #tpu.memory_space<smem>>, %arg2: memref<6x8xf32, #tpu.memory_space<vmem>>, %arg3: memref<6x8xf32, #tpu.memory_space<vmem>>) attributes {dimension_semantics = [#tpu.dimension_semantics<parallel>], iteration_bounds = array<i64: 1>, scalar_prefetch = 0 : i64, scratch_operands = 0 : i64, tpu.core_type = #tpu.core_type<tc>, window_params = [{transform_indices = @transform_0, window_bounds = array<i64: 1>}, {transform_indices = @transform_1, window_bounds = array<i64: 6, 8>}, {transform_indices = @transform_2, window_bounds = array<i64: 6, 8>}]} {
    %c0 = arith.constant 0 : index
    %c0_0 = arith.constant 0 : index
    %0 = vector.load %arg2[%c0, %c0_0] : memref<6x8xf32, #tpu.memory_space<vmem>>, vector<6x8xf32>
    %cst = arith.constant dense<0.000000e+00> : vector<6xf32>
    %1 = vector.multi_reduction <add>, %0, %cst [1] : vector<6x8xf32> to vector<6xf32>
    %2 = vector.shape_cast %1 : vector<6xf32> to vector<6x1xf32>
    %cst_1 = arith.constant 8.000000e+00 : f32
    %3 = vector.broadcast %cst_1 : f32 to vector<6x1xf32>
    %4 = arith.divf %2, %3 : vector<6x1xf32>
    %c0_2 = arith.constant 0 : index
    %5 = memref.load %arg1[%c0_2] : memref<1xf32, #tpu.memory_space<smem>>
    %6 = vector.broadcast %4 : vector<6x1xf32> to vector<6x8xf32>
    %7 = arith.subf %0, %6 : vector<6x8xf32>
    %8 = vector.broadcast %5 : f32 to vector<6x8xf32>
    %9 = arith.mulf %8, %7 : vector<6x8xf32>
    %c0_3 = arith.constant 0 : index
    %c0_4 = arith.constant 0 : index
    %10 = vector.load %arg3[%c0_3, %c0_4] : memref<6x8xf32, #tpu.memory_space<vmem>>, vector<6x8xf32>
    tpu.vector_store %arg3[%c0_3, %c0_4], %9 {strides = array<i32>} : memref<6x8xf32, #tpu.memory_space<vmem>>, vector<6x8xf32>,
    return
  }
  func.func @transform_0(%arg0: i32) -> i32 {
    %c0_i32 = arith.constant 0 : i32
    %c0_i32_0 = arith.constant 0 : i32
    return %c0_i32 : i32
  }
  func.func @transform_1(%arg0: i32) -> (i32, i32) {
    %c0_i32 = arith.constant 0 : i32
    %c0_i32_0 = arith.constant 0 : i32
    return %arg0, %c0_i32 : i32, i32
  }
  func.func @transform_2(%arg0: i32) -> (i32, i32) {
    %c0_i32 = arith.constant 0 : i32
    %c0_i32_0 = arith.constant 0 : i32
    return %arg0, %c0_i32 : i32, i32
  }
}

</mosaic_0001>

<llo_original>
// kernel: tpu_custom_call.1
$region0: #{tpu_custom_call.1}
  #allocation0 [shape = 'u32[]', space=smem, size = 0x4, offset = 0x4, fixed_abs, tag = 'smem constant byte address 0x4 - core index']
  #allocation1 [shape = 'u32[144,128]{1,0:T(1,128)}', space=vmem, size = 0x12000, scoped, tag = 'internal scratch']
  #allocation2 [shape = 'f32[1]{0:T(128)S(6)}', space=smem, size = 0x200, scoped, tag = 'scoped memory for tpu_custom_call.1']
  %s0 = inlined_call_operand.<no memory space> [shape: f32[1], index: 0, kind: input, shape index: {}]
  %s1 = inlined_call_operand.hbm [shape: f32[6,8], index: 1, kind: input, shape index: {}]
  %s2 = inlined_call_operand.hbm [shape: f32[6,8], index: 2, kind: output, shape index: {}]
  %s3 = sld [smem:[#allocation0]]
  $region22: #{tpu_custom_call.1} parent=0
    _
  %s5 = ssub.s32 1, %s3
  %s6 = scalar_select 0, %s5, %s3
  %7 = sst [smem:[#allocation2]] %s0
  $region1: #{tpu_custom_call.1} parent=0
    #allocation3 [shape = 'u8[4096]{0}', space=vmem, size = 0x1000, scoped, tag = 'input window, operand 1, single buffered']
    #allocation4 [shape = 's32[1]{0}', space=sflag, size = 0x4, scoped, tag = 'scoped memory for tpu_custom_call.1']
    #allocation5 [shape = 's32[1]{0}', space=sflag, size = 0x4, scoped, tag = 'scoped memory for tpu_custom_call.1']
    #allocation6 [shape = 'u8[4096]{0}', space=vmem, size = 0x1000, scoped, tag = 'output window, operand 0, single buffered']
    %8 = vsyncpa [#allocation4], 0
    %9 = vsyncpa [#allocation5], 0
    // Predicated region
    $region2: #{tpu_custom_call.1} parent=1 // pred_check
      _
    $region3: #{tpu_custom_call.1} parent=1 // pred_check_branch
      %11 = sbr.rel (0) target = $region5
    $region4: #{tpu_custom_call.1} parent=1 // pred_region
      _
    $region5: #{tpu_custom_call.1} parent=1 // pred_fallthru
      _
    // Predicated region
    $region6: #{tpu_custom_call.1} parent=1 // pred_check
      _
    $region7: #{tpu_custom_call.1} parent=1 // pred_check_branch
      %13 = sbr.rel (0) target = $region9
    $region8: #{tpu_custom_call.1} parent=1 // pred_region
      %s15 = ssub.s32 128, 128
      %16 = vsyncadd [#allocation4], %s15
      %s18 = sshll.u32 [#allocation3], 4
      %s19 = int_to_ptr.vmem [resolvable:$true] %s18
      %21 = dma.hbm_to_vmem [thread:$0]  %s1, 128, %s19, [#allocation4]
    $region9: #{tpu_custom_call.1} parent=1 // pred_fallthru
      _
    // Predicated region
    $region10: #{tpu_custom_call.1} parent=1 // pred_check
      _
    $region11: #{tpu_custom_call.1} parent=1 // pred_check_branch
      %23 = sbr.rel (0) target = $region13
    $region12: #{tpu_custom_call.1} parent=1 // pred_region
      %24 = dma.done [#allocation4], 128
    $region13: #{tpu_custom_call.1} parent=1 // pred_fallthru
      _
    %v25 = vld [vmem:[#allocation3] sm:$0x3f]
    %vm26 = vcmask 62464
    %v27 = vsel %vm26, %v25, 0.0
    %28 = vadd.xlane.f32.xlu0 %v27
    %v29 = vpop.xlane.xlu0 %28
    %v30 = vrcp.pop 8.0
    %v31 = vmul.f32 %v29, %v30
    %s32 = sld [smem:[#allocation2]]
    %v33 = vsub.f32 %v25, %v31
    %v34 = vstv %s32
    %v35 = vmul.f32 %v34, %v33
    %36 = vst.msk [vmem:[#allocation6] sm:$0x3f] %vm26, %v35
    // Predicated region
    $region14: #{tpu_custom_call.1} parent=1 // pred_check
      _
    $region15: #{tpu_custom_call.1} parent=1 // pred_check_branch
      %38 = sbr.rel (0) target = $region17
    $region16: #{tpu_custom_call.1} parent=1 // pred_region
      %s40 = ssub.s32 128, 128
      %41 = vsyncadd [#allocation5], %s40
      %s43 = sshll.u32 [#allocation6], 4
      %s44 = int_to_ptr.vmem [resolvable:$true] %s43
      %46 = dma.vmem_to_hbm [thread:$0]  %s44, 128, %s2, [#allocation5]
    $region17: #{tpu_custom_call.1} parent=1 // pred_fallthru
      _
    // Predicated region
    $region18: #{tpu_custom_call.1} parent=1 // pred_check
      _
    $region19: #{tpu_custom_call.1} parent=1 // pred_check_branch
      %48 = sbr.rel (0) target = $region21
    $region20: #{tpu_custom_call.1} parent=1 // pred_region
      %49 = dma.done [#allocation5], 128
    $region21: #{tpu_custom_call.1} parent=1 // pred_fallthru
      _
    %50 = vsyncpa [#allocation4], 1
    %51 = vsyncpa [#allocation5], 1

</llo_original>
